<compile_context>
chip_gen: v7x
topology: tpu7x:2x2x1
jax: 0.10.0
libtpu: 0.0.40
codegen_flags: <defaults>
</compile_context>

<pallas_src>
import functools
import math

import jax
import jax.numpy as jnp
from jax.experimental import pallas as pl
from jax.experimental.pallas import tpu as pltpu


_VMEM_SPEC = pl.BlockSpec(memory_space=pltpu.MemorySpace.VMEM)
_BF16 = jnp.bfloat16


# ----------------------------------------------------------------------------
# Kernel 1: whole-array VMEM-resident fused forward (small graphs, v5e/v6e).
# ----------------------------------------------------------------------------
def _gpcn_resident_kernel(x_ref, a_ref, first_w_ref, first_b_ref, *rest,
                          feat_layers, T, w_relu, w_relu_A, post_relu_scale,
                          log_softmax):
    n_hidden = feat_layers - 1
    lw_refs = rest[0:n_hidden]
    lb_refs = rest[n_hidden:2 * n_hidden]
    (weight_w_ref, weight_b_ref,
     last_w_ref, last_b_ref) = rest[2 * n_hidden:2 * n_hidden + 4]
    o_ref = rest[-1]

    # ---- feature MLP (dropout = identity at inference) ----
    h = jnp.dot(x_ref[...], first_w_ref[...],
                preferred_element_type=jnp.float32) + first_b_ref[...]
    if w_relu:
        h = jnp.maximum(h, 0.0)
    for lw_ref, lb_ref in zip(lw_refs, lb_refs):
        h = jnp.dot(h.astype(_BF16), lw_ref[...],
                    preferred_element_type=jnp.float32) + lb_ref[...]
        if w_relu:
            h = jnp.maximum(h, 0.0)

    # ---- T residual propagation steps (statically unrolled; res_scale is
    #      already folded into weight_w / weight_b by the wrapper) ----
    if T > 0:
        a = a_ref[...]
        w = weight_w_ref[...]
        b = weight_b_ref[...]
        for _ in range(T):
            wh = jnp.dot(h.astype(_BF16), w,
                         preferred_element_type=jnp.float32) + b
            awh = jnp.dot(a, wh.astype(_BF16),
                          preferred_element_type=jnp.float32)
            if w_relu_A:
                awh = jnp.maximum(awh, 0.0)
                if post_relu_scale is not None:   # only when res_scale < 0
                    awh = awh * post_relu_scale
            h = h + awh

    # ---- last linear (+ log_softmax) over the lane-padded class dim ----
    # Padded classes carry bias -1e30 -> they never influence max / sum-exp.
    logits = jnp.dot(h.astype(_BF16), last_w_ref[...],
                     preferred_element_type=jnp.float32) + last_b_ref[...]
    if log_softmax:
        m = jnp.max(logits, axis=-1, keepdims=True)
        shifted = logits - m
        lse = jnp.log(jnp.sum(jnp.exp(shifted), axis=-1, keepdims=True))
        o_ref[...] = (shifted - lse).astype(o_ref.dtype)
    else:
        o_ref[...] = logits.astype(o_ref.dtype)


# ----------------------------------------------------------------------------
# Kernel 2: streamed-A row-block forward (v7x / large N).
#   grid = (T, row_blocks); A row blocks streamed HBM->VMEM each step,
#   h [N_pad, Hp] (f32) and wh [N_pad, Hp] (bf16) persist in VMEM scratch.
# ----------------------------------------------------------------------------
def _gpcn_streamed_kernel(x_ref, a_ref, first_w_ref, first_b_ref, *rest,
                          feat_layers, w_relu, w_relu_A, post_relu_scale,
                          log_softmax, row_block):
    n_hidden = feat_layers - 1
    lw_refs = rest[0:n_hidden]
    lb_refs = rest[n_hidden:2 * n_hidden]
    (weight_w_ref, weight_b_ref,
     last_w_ref, last_b_ref) = rest[2 * n_hidden:2 * n_hidden + 4]
    o_ref, h_ref, wh_ref = rest[-3], rest[-2], rest[-1]

    t = pl.program_id(0)                       # propagation step (sequential)
    r = pl.program_id(1)                       # node-row block
    row = pl.multiple_of(r * row_block, 8)

    # ---- once, before step 0: feature MLP for ALL rows -> h scratch ----
    @pl.when((t == 0) & (r == 0))
    def _():
        h = jnp.dot(x_ref[...], first_w_ref[...],
                    preferred_element_type=jnp.float32) + first_b_ref[...]
        if w_relu:
            h = jnp.maximum(h, 0.0)
        for lw_ref, lb_ref in zip(lw_refs, lb_refs):
            h = jnp.dot(h.astype(_BF16), lw_ref[...],
                        preferred_element_type=jnp.float32) + lb_ref[...]
            if w_relu:
                h = jnp.maximum(h, 0.0)
        h_ref[...] = h

    # ---- first row block of every step: wh = h @ W + b for ALL rows ----
    @pl.when(r == 0)
    def _():
        wh = jnp.dot(h_ref[...].astype(_BF16), weight_w_ref[...],
                     preferred_element_type=jnp.float32) + weight_b_ref[...]
        wh_ref[...] = wh.astype(wh_ref.dtype)

    # ---- streamed row-block propagation: h[rows] += A[rows, :] @ wh ----
    awh = jnp.dot(a_ref[...], wh_ref[...], preferred_element_type=jnp.float32)
    if w_relu_A:
        awh = jnp.maximum(awh, 0.0)
        if post_relu_scale is not None:        # only when res_scale < 0
            awh = awh * post_relu_scale
    h_ref[pl.ds(row, row_block), :] = h_ref[pl.ds(row, row_block), :] + awh

    # ---- after the last step: final linear + log_softmax for this block ----
    @pl.when(t == pl.num_programs(0) - 1)
    def _():
        hb = h_ref[pl.ds(row, row_block), :].astype(_BF16)
        logits = jnp.dot(hb, last_w_ref[...],
                         preferred_element_type=jnp.float32) + last_b_ref[...]
        if log_softmax:
            m = jnp.max(logits, axis=-1, keepdims=True)
            shifted = logits - m
            lse = jnp.log(jnp.sum(jnp.exp(shifted), axis=-1, keepdims=True))
            o_ref[...] = (shifted - lse).astype(o_ref.dtype)
        else:
            o_ref[...] = logits.astype(o_ref.dtype)


# ----------------------------------------------------------------------------
# Parameter prep: bf16 cast, lane padding, res_scale fold.
# ----------------------------------------------------------------------------
def _prep_params(params, res_scale, w_relu_A):
    f32 = jnp.float32
    first_w = jnp.asarray(params["first_w"], f32)
    nf, hid = first_w.shape
    ncls = params["last_w"].shape[1]
    hp = int(max(128, pl.cdiv(hid, 128) * 128))
    cp = int(max(128, pl.cdiv(ncls, 128) * 128))

    # relu(s*y) == s*relu(y) only for s >= 0; the non-relu branch is
    # sign-agnostic.  When folding is illegal, keep a cheap O(N*H) post-relu
    # scalar multiply in the kernel instead of ever scaling the NxN adjacency.
    fold = (not w_relu_A) or (res_scale >= 0)
    w_scale = float(res_scale) if fold else 1.0
    post_relu_scale = None if fold else float(res_scale)

    def pad2(a, rows, cols):
        a = jnp.asarray(a, f32)
        out = jnp.zeros((rows, cols), f32)
        return out.at[:a.shape[0], :a.shape[1]].set(a)

    p = dict(
        first_w=pad2(first_w, nf, hp).astype(_BF16),
        first_b=pad2(jnp.asarray(params["first_b"], f32).reshape(1, -1), 1, hp),
        layers_X_w=[pad2(w, hp, hp).astype(_BF16) for w in params["layers_X_w"]],
        layers_X_b=[pad2(jnp.asarray(b, f32).reshape(1, -1), 1, hp)
                    for b in params["layers_X_b"]],
        weight_w=(pad2(params["weight_w"], hp, hp) * w_scale).astype(_BF16),
        weight_b=pad2(jnp.asarray(params["weight_b"], f32).reshape(1, -1),
                      1, hp) * w_scale,
        last_w=pad2(params["last_w"], hp, cp).astype(_BF16),
        last_b=jnp.full((1, cp), -1e30, f32).at[:, :ncls].set(
            jnp.asarray(params["last_b"], f32).reshape(1, -1)),
    )
    return p, hp, cp, post_relu_scale


# ----------------------------------------------------------------------------
# Wrapper
# ----------------------------------------------------------------------------
def gpcn_forward(x, params, A1, *, feat_layers, T, res_scale, w_relu, w_relu_A,
                 criterion="log_softmax", row_block=256, force_streamed=None):
    """GPCN.forward (dropout = identity).  Returns the lane-padded output slab
    [N(_pad), 128*ceil(nclass/128)]; slice [:N, :nclass] downstream only if the
    consumer needs the exact class count (avoids a post-call copy here)."""
    n, nf = x.shape
    log_softmax = (criterion == "log_softmax")
    p, hp, cp, post_relu_scale = _prep_params(params, res_scale, w_relu_A)

    x_bf = x.astype(_BF16)
    a_bf = A1.astype(_BF16)

    # Per-generation VMEM capacity (128 MiB v5e/v6e, 64 MiB v7x).
    try:
        vmem_cap = int(pltpu.get_tpu_info().vmem_capacity_bytes)
    except Exception:
        vmem_cap = 64 << 20
    vmem_cap = max(32 << 20, min(vmem_cap, 128 << 20))

    weight_bytes = sum(int(a.size) * a.dtype.itemsize
                       for a in jax.tree_util.tree_leaves(p))
    resident_bytes = (2 * n * nf + 2 * n * n + weight_bytes
                      + 4 * n * hp + 4 * n * cp)

    # Generation fork: keep A whole-array resident whenever it fits (v5e/v6e
    # with 128 MiB VMEM and slower HBM), stream A row blocks otherwise (v7x).
    use_streamed = (T > 0) and (resident_bytes > int(0.7 * vmem_cap))
    if force_streamed is not None:
        use_streamed = bool(force_streamed) and T > 0

    flops = int(2 * n * nf * hp + 2 * (feat_layers - 1) * n * hp * hp
                + T * (2 * n * hp * hp + 2 * n * n * hp) + 2 * n * hp * cp)
    transcendentals = int(n * cp + n) if log_softmax else 0

    if not use_streamed:
        inputs = [x_bf, a_bf, p["first_w"], p["first_b"],
                  *p["layers_X_w"], *p["layers_X_b"],
                  p["weight_w"], p["weight_b"], p["last_w"], p["last_b"]]
        kernel = functools.partial(
            _gpcn_resident_kernel, feat_layers=feat_layers, T=T,
            w_relu=w_relu, w_relu_A=w_relu_A,
            post_relu_scale=post_relu_scale, log_softmax=log_softmax)
        return pl.pallas_call(
            kernel,
            out_shape=jax.ShapeDtypeStruct((n, cp), jnp.float32),
            in_specs=[_VMEM_SPEC] * len(inputs),
            out_specs=_VMEM_SPEC,
            compiler_params=pltpu.CompilerParams(
                vmem_limit_bytes=int(min(vmem_cap,
                                         max(2 * resident_bytes, 32 << 20)))),
            cost_estimate=pl.CostEstimate(
                flops=flops, transcendentals=transcendentals,
                bytes_accessed=int(resident_bytes)),
        )(*inputs)

    # ------------------------- streamed path -------------------------------
    rb = max(8, (int(row_block) // 8) * 8)
    align = int(rb * 128 // math.gcd(rb, 128))           # lcm(rb, 128)
    n_pad = int(pl.cdiv(n, align) * align)
    n_row_blocks = n_pad // rb

    x_p = jnp.zeros((n_pad, nf), _BF16).at[:n].set(x_bf)
    a_p = jnp.zeros((n_pad, n_pad), _BF16).at[:n, :n].set(a_bf)

    inputs = [x_p, a_p, p["first_w"], p["first_b"],
              *p["layers_X_w"], *p["layers_X_b"],
              p["weight_w"], p["weight_b"], p["last_w"], p["last_b"]]

    whole = lambda t, r: (0, 0)                           # resident across grid
    in_specs = [pl.BlockSpec((n_pad, nf), whole),
                # A row blocks re-streamed HBM->VMEM every step; sweep the
                # buffer depth (2-3) on real shapes.
                pl.BlockSpec((rb, n_pad), lambda t, r: (r, 0),
                             pipeline_mode=pl.Buffered(2))]
    in_specs += [pl.BlockSpec(a.shape, whole) for a in inputs[2:]]
    out_specs = pl.BlockSpec((rb, cp), lambda t, r: (r, 0))

    kernel = functools.partial(
        _gpcn_streamed_kernel, feat_layers=feat_layers,
        w_relu=w_relu, w_relu_A=w_relu_A,
        post_relu_scale=post_relu_scale, log_softmax=log_softmax,
        row_block=rb)

    streamed_bytes = (weight_bytes + 2 * n_pad * nf
                      + 4 * n_pad * hp + 2 * n_pad * hp      # h + wh scratch
                      + 2 * (2 * rb * n_pad)                 # A double buffer
                      + 2 * (4 * rb * cp))                   # output blocks

    # TODO(synk): for real (sparse) graphs, drive the A index_map with
    # per-row-block nonzero column-block lists via PrefetchScalarGridSpec
    # (block-sparse spmm) instead of streaming dense all-zero tiles.
    # TODO(synk): v7x megacore - shard the feature MLP / final linear over a
    # parallel row axis in a separate call; the propagation step axis must stay
    # sequential because each step reads the full previous h.
    grid_spec = pltpu.PrefetchScalarGridSpec(
        num_scalar_prefetch=0,
        grid=(T, n_row_blocks),
        in_specs=in_specs,
        out_specs=out_specs,
        scratch_shapes=[pltpu.VMEM((n_pad, hp), jnp.float32),   # h (f32 acc)
                        pltpu.VMEM((n_pad, hp), _BF16)])        # wh (MXU in)

    return pl.pallas_call(
        kernel,
        out_shape=jax.ShapeDtypeStruct((n_pad, cp), jnp.float32),
        grid_spec=grid_spec,
        compiler_params=pltpu.CompilerParams(
            dimension_semantics=("arbitrary", "arbitrary"),
            vmem_limit_bytes=int(min(vmem_cap,
                                     max(2 * streamed_bytes, 32 << 20)))),
        cost_estimate=pl.CostEstimate(
            flops=flops, transcendentals=transcendentals,
            bytes_accessed=int(weight_bytes + 2 * n_pad * nf
                               + T * 2 * n_pad * n_pad + 4 * n_pad * cp)),
    )(*inputs)


# ----------------------------------------------------------------------------
# Pure-JAX f32 reference
# ----------------------------------------------------------------------------
def gpcn_reference(x, params, A1, *, feat_layers, T, res_scale,
                   w_relu, w_relu_A):
    out = x @ params["first_w"] + params["first_b"]
    if w_relu:
        out = jnp.maximum(out, 0.0)
    for a in range(1, feat_layers):
        out = out @ params["layers_X_w"][a - 1] + params["layers_X_b"][a - 1]
        if w_relu:
            out = jnp.maximum(out, 0.0)
    for _ in range(T):
        wh = out @ params["weight_w"] + params["weight_b"]
        awh = A1 @ wh
        if w_relu_A:
            awh = jnp.maximum(awh, 0.0)
        out = out + res_scale * awh
    logits = out @ params["last_w"] + params["last_b"]
    return jax.nn.log_softmax(logits, axis=-1)


# ----------------------------------------------------------------------------
# Main
# ----------------------------------------------------------------------------
if __name__ == "__main__":
    num_nodes = 64
    n_features = 32
    nc_hidden = 32
    nclass = 8
    feat_layers = 2
    T = 3
    res_scale = 0.5
    w_relu = True
    w_relu_A = False

    key = jax.random.PRNGKey(0)
    keys = jax.random.split(key, 12)

    def init_linear(k, fan_in, fan_out):
        bound = 1.0 / (fan_in ** 0.5)
        kw, kb = jax.random.split(k)
        w = jax.random.uniform(kw, (fan_in, fan_out), jnp.float32, -bound, bound)
        b = jax.random.uniform(kb, (1, fan_out), jnp.float32, -bound, bound)
        return w, b

    first_w, first_b = init_linear(keys[0], n_features, nc_hidden)
    weight_w, weight_b = init_linear(keys[1], nc_hidden, nc_hidden)
    layers_X_w, layers_X_b = [], []
    for a in range(1, feat_layers):
        lw, lb = init_linear(keys[1 + a], nc_hidden, nc_hidden)
        layers_X_w.append(lw)
        layers_X_b.append(lb)
    last_w, last_b = init_linear(keys[8], nc_hidden, nclass)

    params = dict(first_w=first_w, first_b=first_b,
                  weight_w=weight_w, weight_b=weight_b,
                  layers_X_w=layers_X_w, layers_X_b=layers_X_b,
                  last_w=last_w, last_b=last_b)

    # Dense row-normalized adjacency standing in for the sparse A1 (torch.spmm).
    adj_logits = jax.random.uniform(keys[9], (num_nodes, num_nodes), jnp.float32)
    adj = (adj_logits > 0.8).astype(jnp.float32) + jnp.eye(num_nodes, dtype=jnp.float32)
    A1 = adj / jnp.sum(adj, axis=-1, keepdims=True)

    x = jax.random.normal(keys[10], (num_nodes, n_features), jnp.float32)

    kwargs = dict(feat_layers=feat_layers, T=T, res_scale=res_scale,
                  w_relu=w_relu, w_relu_A=w_relu_A)

    ref = gpcn_reference(x, params, A1, **kwargs)

    # Path 1: whole-VMEM-resident fused kernel (default for graphs that fit).
    out_res = gpcn_forward(x, params, A1, force_streamed=False, **kwargs)
    out_res = jax.block_until_ready(out_res)[:num_nodes, :nclass]

    # Path 2: streamed-A row-block kernel (v7x / large-N path), forced here at
    # a tiny shape (row_block=64 -> 2 row blocks) to validate it end-to-end.
    out_str = gpcn_forward(x, params, A1, force_streamed=True, row_block=64,
                           **kwargs)
    out_str = jax.block_until_ready(out_str)[:num_nodes, :nclass]

    assert out_res.shape == (num_nodes, nclass)
    assert out_str.shape == (num_nodes, nclass)
    # bf16 matmul inputs (f32 accumulation) -> loosened tolerance vs f32 ref.
    assert jnp.allclose(out_res, ref, atol=5e-2, rtol=5e-2), "resident mismatch"
    assert jnp.allclose(out_str, ref, atol=5e-2, rtol=5e-2), "streamed mismatch"

    print("KERNEL_OK")
</pallas_src>

<mosaic_0001>
module attributes {stable_mosaic.version = 11 : i64} {
  func.func @_gpcn_resident_kernel(%arg0: memref<64x32xbf16, #tpu.memory_space<vmem>>, %arg1: memref<64x64xbf16, #tpu.memory_space<vmem>>, %arg2: memref<32x128xbf16, #tpu.memory_space<vmem>>, %arg3: memref<1x128xf32, #tpu.memory_space<vmem>>, %arg4: memref<128x128xbf16, #tpu.memory_space<vmem>>, %arg5: memref<1x128xf32, #tpu.memory_space<vmem>>, %arg6: memref<128x128xbf16, #tpu.memory_space<vmem>>, %arg7: memref<1x128xf32, #tpu.memory_space<vmem>>, %arg8: memref<128x128xbf16, #tpu.memory_space<vmem>>, %arg9: memref<1x128xf32, #tpu.memory_space<vmem>>, %arg10: memref<64x128xf32, #tpu.memory_space<vmem>>) attributes {dimension_semantics = [], scalar_prefetch = 0 : i64, scratch_operands = 0 : i64, tpu.core_type = #tpu.core_type<tc>} {
    %c0 = arith.constant 0 : index
    %c0_0 = arith.constant 0 : index
    %0 = vector.load %arg0[%c0, %c0_0] : memref<64x32xbf16, #tpu.memory_space<vmem>>, vector<64x32xbf16>
    %c0_1 = arith.constant 0 : index
    %c0_2 = arith.constant 0 : index
    %1 = vector.load %arg2[%c0_1, %c0_2] : memref<32x128xbf16, #tpu.memory_space<vmem>>, vector<32x128xbf16>
    %cst = arith.constant dense<0.000000e+00> : vector<64x128xf32>
    %2 = tpu.matmul %0, %1, %cst {dimension_numbers = #tpu.dot_dimension_numbers<[1], [0], [0], [1], [0, 0, 1, 1], [], []>} : vector<64x32xbf16>, vector<32x128xbf16>, vector<64x128xf32> -> vector<64x128xf32>
    %c0_3 = arith.constant 0 : index
    %c0_4 = arith.constant 0 : index
    %3 = vector.load %arg3[%c0_3, %c0_4] : memref<1x128xf32, #tpu.memory_space<vmem>>, vector<1x128xf32>
    %4 = vector.broadcast %3 : vector<1x128xf32> to vector<64x128xf32>
    %5 = arith.addf %2, %4 : vector<64x128xf32>
    %cst_5 = arith.constant 0.000000e+00 : f32
    %6 = vector.broadcast %cst_5 : f32 to vector<64x128xf32>
    %7 = arith.maximumf %5, %6 : vector<64x128xf32>
    %8 = arith.truncf %7 : vector<64x128xf32> to vector<64x128xbf16>
    %c0_6 = arith.constant 0 : index
    %c0_7 = arith.constant 0 : index
    %9 = vector.load %arg4[%c0_6, %c0_7] : memref<128x128xbf16, #tpu.memory_space<vmem>>, vector<128x128xbf16>
    %cst_8 = arith.constant dense<0.000000e+00> : vector<64x128xf32>
    %10 = tpu.matmul %8, %9, %cst_8 {dimension_numbers = #tpu.dot_dimension_numbers<[1], [0], [0], [1], [0, 0, 1, 1], [], []>} : vector<64x128xbf16>, vector<128x128xbf16>, vector<64x128xf32> -> vector<64x128xf32>
    %c0_9 = arith.constant 0 : index
    %c0_10 = arith.constant 0 : index
    %11 = vector.load %arg5[%c0_9, %c0_10] : memref<1x128xf32, #tpu.memory_space<vmem>>, vector<1x128xf32>
    %12 = vector.broadcast %11 : vector<1x128xf32> to vector<64x128xf32>
    %13 = arith.addf %10, %12 : vector<64x128xf32>
    %cst_11 = arith.constant 0.000000e+00 : f32
    %14 = vector.broadcast %cst_11 : f32 to vector<64x128xf32>
    %15 = arith.maximumf %13, %14 : vector<64x128xf32>
    %c0_12 = arith.constant 0 : index
    %c0_13 = arith.constant 0 : index
    %16 = vector.load %arg1[%c0_12, %c0_13] : memref<64x64xbf16, #tpu.memory_space<vmem>>, vector<64x64xbf16>
    %c0_14 = arith.constant 0 : index
    %c0_15 = arith.constant 0 : index
    %17 = vector.load %arg6[%c0_14, %c0_15] : memref<128x128xbf16, #tpu.memory_space<vmem>>, vector<128x128xbf16>
    %c0_16 = arith.constant 0 : index
    %c0_17 = arith.constant 0 : index
    %18 = vector.load %arg7[%c0_16, %c0_17] : memref<1x128xf32, #tpu.memory_space<vmem>>, vector<1x128xf32>
    %19 = arith.truncf %15 : vector<64x128xf32> to vector<64x128xbf16>
    %cst_18 = arith.constant dense<0.000000e+00> : vector<64x128xf32>
    %20 = tpu.matmul %19, %17, %cst_18 {dimension_numbers = #tpu.dot_dimension_numbers<[1], [0], [0], [1], [0, 0, 1, 1], [], []>} : vector<64x128xbf16>, vector<128x128xbf16>, vector<64x128xf32> -> vector<64x128xf32>
    %21 = vector.broadcast %18 : vector<1x128xf32> to vector<64x128xf32>
    %22 = arith.addf %20, %21 : vector<64x128xf32>
    %23 = arith.truncf %22 : vector<64x128xf32> to vector<64x128xbf16>
    %cst_19 = arith.constant dense<0.000000e+00> : vector<64x128xf32>
    %24 = tpu.matmul %16, %23, %cst_19 {dimension_numbers = #tpu.dot_dimension_numbers<[1], [0], [0], [1], [0, 0, 1, 1], [], []>} : vector<64x64xbf16>, vector<64x128xbf16>, vector<64x128xf32> -> vector<64x128xf32>
    %25 = arith.addf %15, %24 : vector<64x128xf32>
    %26 = arith.truncf %25 : vector<64x128xf32> to vector<64x128xbf16>
    %cst_20 = arith.constant dense<0.000000e+00> : vector<64x128xf32>
    %27 = tpu.matmul %26, %17, %cst_20 {dimension_numbers = #tpu.dot_dimension_numbers<[1], [0], [0], [1], [0, 0, 1, 1], [], []>} : vector<64x128xbf16>, vector<128x128xbf16>, vector<64x128xf32> -> vector<64x128xf32>
    %28 = vector.broadcast %18 : vector<1x128xf32> to vector<64x128xf32>
    %29 = arith.addf %27, %28 : vector<64x128xf32>
    %30 = arith.truncf %29 : vector<64x128xf32> to vector<64x128xbf16>
    %cst_21 = arith.constant dense<0.000000e+00> : vector<64x128xf32>
    %31 = tpu.matmul %16, %30, %cst_21 {dimension_numbers = #tpu.dot_dimension_numbers<[1], [0], [0], [1], [0, 0, 1, 1], [], []>} : vector<64x64xbf16>, vector<64x128xbf16>, vector<64x128xf32> -> vector<64x128xf32>
    %32 = arith.addf %25, %31 : vector<64x128xf32>
    %33 = arith.truncf %32 : vector<64x128xf32> to vector<64x128xbf16>
    %cst_22 = arith.constant dense<0.000000e+00> : vector<64x128xf32>
    %34 = tpu.matmul %33, %17, %cst_22 {dimension_numbers = #tpu.dot_dimension_numbers<[1], [0], [0], [1], [0, 0, 1, 1], [], []>} : vector<64x128xbf16>, vector<128x128xbf16>, vector<64x128xf32> -> vector<64x128xf32>
    %35 = vector.broadcast %18 : vector<1x128xf32> to vector<64x128xf32>
    %36 = arith.addf %34, %35 : vector<64x128xf32>
    %37 = arith.truncf %36 : vector<64x128xf32> to vector<64x128xbf16>
    %cst_23 = arith.constant dense<0.000000e+00> : vector<64x128xf32>
    %38 = tpu.matmul %16, %37, %cst_23 {dimension_numbers = #tpu.dot_dimension_numbers<[1], [0], [0], [1], [0, 0, 1, 1], [], []>} : vector<64x64xbf16>, vector<64x128xbf16>, vector<64x128xf32> -> vector<64x128xf32>
    %39 = arith.addf %32, %38 : vector<64x128xf32>
    %40 = arith.truncf %39 : vector<64x128xf32> to vector<64x128xbf16>
    %c0_24 = arith.constant 0 : index
    %c0_25 = arith.constant 0 : index
    %41 = vector.load %arg8[%c0_24, %c0_25] : memref<128x128xbf16, #tpu.memory_space<vmem>>, vector<128x128xbf16>
    %cst_26 = arith.constant dense<0.000000e+00> : vector<64x128xf32>
    %42 = tpu.matmul %40, %41, %cst_26 {dimension_numbers = #tpu.dot_dimension_numbers<[1], [0], [0], [1], [0, 0, 1, 1], [], []>} : vector<64x128xbf16>, vector<128x128xbf16>, vector<64x128xf32> -> vector<64x128xf32>
    %c0_27 = arith.constant 0 : index
    %c0_28 = arith.constant 0 : index
    %43 = vector.load %arg9[%c0_27, %c0_28] : memref<1x128xf32, #tpu.memory_space<vmem>>, vector<1x128xf32>
    %44 = vector.broadcast %43 : vector<1x128xf32> to vector<64x128xf32>
    %45 = arith.addf %42, %44 : vector<64x128xf32>
    %cst_29 = arith.constant dense<0xFF800000> : vector<64xf32>
    %46 = vector.multi_reduction <maximumf>, %45, %cst_29 [1] : vector<64x128xf32> to vector<64xf32>
    %47 = vector.shape_cast %46 : vector<64xf32> to vector<64x1xf32>
    %48 = vector.broadcast %47 : vector<64x1xf32> to vector<64x128xf32>
    %49 = arith.subf %45, %48 : vector<64x128xf32>
    %50 = math.exp %49 : vector<64x128xf32>
    %cst_30 = arith.constant dense<0.000000e+00> : vector<64xf32>
    %51 = vector.multi_reduction <add>, %50, %cst_30 [1] : vector<64x128xf32> to vector<64xf32>
    %52 = vector.shape_cast %51 : vector<64xf32> to vector<64x1xf32>
    %53 = math.log %52 : vector<64x1xf32>
    %54 = vector.broadcast %53 : vector<64x1xf32> to vector<64x128xf32>
    %55 = arith.subf %49, %54 : vector<64x128xf32>
    %c0_31 = arith.constant 0 : index
    %c0_32 = arith.constant 0 : index
    %56 = vector.load %arg10[%c0_31, %c0_32] : memref<64x128xf32, #tpu.memory_space<vmem>>, vector<64x128xf32>
    tpu.vector_store %arg10[%c0_31, %c0_32], %55 {strides = array<i32>} : memref<64x128xf32, #tpu.memory_space<vmem>>, vector<64x128xf32>,
    return
  }
}

</mosaic_0001>

<llo_original>
// kernel: tpu_custom_call.1
$region0: #{tpu_custom_call.1}
  #allocation0 [shape = 'u32[]', space=smem, size = 0x4, offset = 0x4, fixed_abs, tag = 'smem constant byte address 0x4 - core index']
  #allocation1 [shape = 'u32[144,128]{1,0:T(1,128)}', space=vmem, size = 0x12000, scoped, tag = 'internal scratch']
  %s0 = inlined_call_operand.vmem [shape: bf16[64,32], index: 0, kind: input, shape index: {}]
  %s1 = inlined_call_operand.hbm [shape: bf16[64,64], index: 1, kind: input, shape index: {}]
  %s2 = inlined_call_operand.hbm [shape: bf16[32,128], index: 2, kind: input, shape index: {}]
  %s3 = inlined_call_operand.vmem [shape: f32[1,128], index: 3, kind: input, shape index: {}]
  %s4 = inlined_call_operand.hbm [shape: bf16[128,128], index: 4, kind: input, shape index: {}]
  %s5 = inlined_call_operand.vmem [shape: f32[1,128], index: 5, kind: input, shape index: {}]
  %s6 = inlined_call_operand.vmem [shape: bf16[128,128], index: 6, kind: input, shape index: {}]
  %s7 = inlined_call_operand.vmem [shape: f32[1,128], index: 7, kind: input, shape index: {}]
  %s8 = inlined_call_operand.hbm [shape: bf16[128,128], index: 8, kind: input, shape index: {}]
  %s9 = inlined_call_operand.vmem [shape: f32[1,128], index: 9, kind: input, shape index: {}]
  %s10 = inlined_call_operand.hbm [shape: f32[64,128], index: 10, kind: output, shape index: {}]
  %s11 = sld [smem:[#allocation0]]
  $region66: #{tpu_custom_call.1} parent=0
    _
  %s13 = ssub.s32 1, %s11
  %s14 = scalar_select 0, %s13, %s11
  $region1: #{tpu_custom_call.1} parent=0
    #allocation2 [shape = 'u8[16384]{0}', space=vmem, size = 0x4000, scoped, tag = 'input window, operand 1, single buffered']
    #allocation3 [shape = 's32[1]{0}', space=sflag, size = 0x4, scoped, tag = 'scoped memory for tpu_custom_call.1']
    #allocation4 [shape = 's32[1]{0}', space=sflag, size = 0x4, scoped, tag = 'scoped memory for tpu_custom_call.1']
    #allocation5 [shape = 'u8[8192]{0}', space=vmem, size = 0x2000, scoped, tag = 'input window, operand 2, single buffered']
    #allocation6 [shape = 's32[1]{0}', space=sflag, size = 0x4, scoped, tag = 'scoped memory for tpu_custom_call.1']
    #allocation7 [shape = 'u8[32768]{0}', space=vmem, size = 0x8000, scoped, tag = 'input window, operand 4, single buffered']
    #allocation8 [shape = 'u8[32768]{0}', space=vmem, size = 0x8000, scoped, tag = 'input window, operand 8, single buffered']
    #allocation9 [shape = 's32[1]{0}', space=sflag, size = 0x4, scoped, tag = 'scoped memory for tpu_custom_call.1']
    #allocation10 [shape = 'u8[32768]{0}', space=vmem, size = 0x8000, scoped, tag = 'output window, operand 0, single buffered']
    %15 = vsyncpa [#allocation3], 0
    %16 = vsyncpa [#allocation6], 0
    %17 = vsyncpa [#allocation9], 0
    %18 = vsyncpa [#allocation4], 0
    // Predicated region
    $region2: #{tpu_custom_call.1} parent=1 // pred_check
      _
    $region3: #{tpu_custom_call.1} parent=1 // pred_check_branch
      %20 = sbr.rel (0) target = $region5
    $region4: #{tpu_custom_call.1} parent=1 // pred_region
      _
    $region5: #{tpu_custom_call.1} parent=1 // pred_fallthru
      _
    // Predicated region
    $region6: #{tpu_custom_call.1} parent=1 // pred_check
      _
    $region7: #{tpu_custom_call.1} parent=1 // pred_check_branch
      %22 = sbr.rel (0) target = $region9
    $region8: #{tpu_custom_call.1} parent=1 // pred_region
      %s24 = ssub.s32 512, 512
      %25 = vsyncadd [#allocation3], %s24
      %s26 = sshll.u32 [#allocation2], 4
      %s27 = int_to_ptr.vmem [resolvable:$true] %s26
      %32 = dma.hbm_to_vmem [thread:$0]  %s1, 512, %s27, [#allocation3], 64, 64, 4
    $region9: #{tpu_custom_call.1} parent=1 // pred_fallthru
      _
    // Predicated region
    $region10: #{tpu_custom_call.1} parent=1 // pred_check
      _
    $region11: #{tpu_custom_call.1} parent=1 // pred_check_branch
      %34 = sbr.rel (0) target = $region13
    $region12: #{tpu_custom_call.1} parent=1 // pred_region
      %s36 = ssub.s32 256, 256
      %37 = vsyncadd [#allocation6], %s36
      %s38 = sshll.u32 [#allocation5], 4
      %s39 = int_to_ptr.vmem [resolvable:$true] %s38
      %44 = dma.hbm_to_vmem [thread:$0]  %s2, 256, %s39, [#allocation6], 64, 64, 4
    $region13: #{tpu_custom_call.1} parent=1 // pred_fallthru
      _
    // Predicated region
    $region14: #{tpu_custom_call.1} parent=1 // pred_check
      _
    $region15: #{tpu_custom_call.1} parent=1 // pred_check_branch
      %46 = sbr.rel (0) target = $region17
    $region16: #{tpu_custom_call.1} parent=1 // pred_region
      _
    $region17: #{tpu_custom_call.1} parent=1 // pred_fallthru
      _
    // Predicated region
    $region18: #{tpu_custom_call.1} parent=1 // pred_check
      _
    $region19: #{tpu_custom_call.1} parent=1 // pred_check_branch
      %48 = sbr.rel (0) target = $region21
    $region20: #{tpu_custom_call.1} parent=1 // pred_region
      %s50 = ssub.s32 1024, 1024
      %51 = vsyncadd [#allocation6], %s50
      %s52 = sshll.u32 [#allocation7], 4
      %s53 = int_to_ptr.vmem [resolvable:$true] %s52
      %58 = dma.hbm_to_vmem [thread:$0]  %s4, 1024, %s53, [#allocation6], 64, 64, 4
    $region21: #{tpu_custom_call.1} parent=1 // pred_fallthru
      _
    // Predicated region
    $region22: #{tpu_custom_call.1} parent=1 // pred_check
      _
    $region23: #{tpu_custom_call.1} parent=1 // pred_check_branch
      %60 = sbr.rel (0) target = $region25
    $region24: #{tpu_custom_call.1} parent=1 // pred_region
      _
    $region25: #{tpu_custom_call.1} parent=1 // pred_fallthru
      _
    // Predicated region
    $region26: #{tpu_custom_call.1} parent=1 // pred_check
      _
    $region27: #{tpu_custom_call.1} parent=1 // pred_check_branch
      %62 = sbr.rel (0) target = $region29
    $region28: #{tpu_custom_call.1} parent=1 // pred_region
      _
    $region29: #{tpu_custom_call.1} parent=1 // pred_fallthru
      _
    // Predicated region
    $region30: #{tpu_custom_call.1} parent=1 // pred_check
      _
    $region31: #{tpu_custom_call.1} parent=1 // pred_check_branch
      %64 = sbr.rel (0) target = $region33
    $region32: #{tpu_custom_call.1} parent=1 // pred_region
      _
    $region33: #{tpu_custom_call.1} parent=1 // pred_fallthru
      _
    // Predicated region
    $region34: #{tpu_custom_call.1} parent=1 // pred_check
      _
    $region35: #{tpu_custom_call.1} parent=1 // pred_check_branch
      %66 = sbr.rel (0) target = $region37
    $region36: #{tpu_custom_call.1} parent=1 // pred_region
      %s68 = ssub.s32 1024, 1024
      %69 = vsyncadd [#allocation9], %s68
      %s70 = sshll.u32 [#allocation8], 4
      %s71 = int_to_ptr.vmem [resolvable:$true] %s70
      %76 = dma.hbm_to_vmem [thread:$0]  %s8, 1024, %s71, [#allocation9], 64, 64, 4
    $region37: #{tpu_custom_call.1} parent=1 // pred_fallthru
      _
    // Predicated region
    $region38: #{tpu_custom_call.1} parent=1 // pred_check
      _
    $region39: #{tpu_custom_call.1} parent=1 // pred_check_branch
      %78 = sbr.rel (0) target = $region41
    $region40: #{tpu_custom_call.1} parent=1 // pred_region
      _
    $region41: #{tpu_custom_call.1} parent=1 // pred_fallthru
      _
    // Predicated region
    $region42: #{tpu_custom_call.1} parent=1 // pred_check
      _
    $region43: #{tpu_custom_call.1} parent=1 // pred_check_branch
      %80 = sbr.rel (0) target = $region45
    $region44: #{tpu_custom_call.1} parent=1 // pred_region
      %81 = dma.done [#allocation3], 512
    $region45: #{tpu_custom_call.1} parent=1 // pred_fallthru
      _
    // Predicated region
    $region46: #{tpu_custom_call.1} parent=1 // pred_check
      _
    $region47: #{tpu_custom_call.1} parent=1 // pred_check_branch
      %83 = sbr.rel (0) target = $region49
    $region48: #{tpu_custom_call.1} parent=1 // pred_region
      %84 = dma.done [#allocation6], 256
    $region49: #{tpu_custom_call.1} parent=1 // pred_fallthru
      _
    // Predicated region
    $region50: #{tpu_custom_call.1} parent=1 // pred_check
      _
    $region51: #{tpu_custom_call.1} parent=1 // pred_check_branch
      %86 = sbr.rel (0) target = $region53
    $region52: #{tpu_custom_call.1} parent=1 // pred_region
      %87 = dma.done [#allocation6], 1024
    $region53: #{tpu_custom_call.1} parent=1 // pred_fallthru
      _
    // Predicated region
    $region54: #{tpu_custom_call.1} parent=1 // pred_check
      _
    $region55: #{tpu_custom_call.1} parent=1 // pred_check_branch
      %89 = sbr.rel (0) target = $region57
    $region56: #{tpu_custom_call.1} parent=1 // pred_region
      %90 = dma.done [#allocation9], 1024
    $region57: #{tpu_custom_call.1} parent=1 // pred_fallthru
      _
    %v92 = vld [vmem:[%s0] sm:$0xf]
    %v93 = vld [vmem:[%s0 + $0x4] sm:$0xf]
    %v94 = vld [vmem:[%s0 + $0x8] sm:$0xf]
    %v95 = vld [vmem:[%s0 + $0xc] sm:$0xf]
    %v96 = vld [vmem:[%s0 + $0x10] sm:$0xf]
    %v97 = vld [vmem:[%s0 + $0x14] sm:$0xf]
    %v98 = vld [vmem:[%s0 + $0x18] sm:$0xf]
    %v99 = vld [vmem:[%s0 + $0x1c] sm:$0xf]
    %v100 = vld [vmem:[#allocation5] sm:$0xf]
    %v101 = vld [vmem:[#allocation5 + $0x4] sm:$0xf]
    %v102 = vld [vmem:[#allocation5 + $0x8] sm:$0xf]
    %v103 = vld [vmem:[#allocation5 + $0xc] sm:$0xf]
    %v104 = vld [vmem:[%s3] sm:$0x1]
    %v106 = vlaneseq
    %v107 = vshrl.u32 %v106, 7
    %v108 = vsub.s32 0, %v107
    %v109 = vrot.slane %v104, %v108
    %v119 = vunpack.c.l.b16 %v92
    %v120 = vunpack.c.l.b16 %v93
    %v121 = vunpack.c.l.b16 %v94
    %v122 = vunpack.c.l.b16 %v95
    %v123 = vunpack.c.l.b16 %v96
    %v124 = vunpack.c.l.b16 %v97
    %v125 = vunpack.c.l.b16 %v98
    %v126 = vunpack.c.l.b16 %v99
    %v127 = vpack.c.b16 %v120, %v119
    %v128 = vpack.c.b16 %v122, %v121
    %v129 = vpack.c.b16 %v124, %v123
    %v130 = vpack.c.b16 %v126, %v125
    %v135 = vunpack.c.l.b16 %v100
    %v136 = vunpack.c.l.b16 %v101
    %v137 = vunpack.c.l.b16 %v102
    %v138 = vunpack.c.l.b16 %v103
    %v139 = vpack.c.b16 %v136, %v135
    %v140 = vpack.c.b16 %v138, %v137
    %vm143 = vcmask 261120
    %v145 = vsel %vm143, %v127, 0
    %v148 = vsel %vm143, %v128, 0
    %v151 = vsel %vm143, %v129, 0
    %v154 = vsel %vm143, %v130, 0
    %156 = vmatprep.subr.bf16.mxu0 0
    %157 = vmatpush1.bf16.msra.mxu0 %v139
    %158 = vmatprep.subr.bf16.mxu0 0
    %159 = vmatpush1.bf16.msra.mxu0 %v140
    %160 = vmatprep.subr.bf16.mxu0 0
    %161 = vmatpush1.bf16.msra.mxu0 0
    %162 = vmatprep.subr.bf16.mxu0 0
    %163 = vmatpush1.bf16.msra.mxu0 0
    %164 = vmatprep.subr.bf16.mxu0 0
    %165 = vmatpush1.bf16.msra.mxu0 0
    %166 = vmatprep.subr.bf16.mxu0 0
    %167 = vmatpush1.bf16.msra.mxu0 0
    %168 = vmatprep.subr.bf16.mxu0 0
    %169 = vmatpush1.bf16.msra.mxu0 0
    %170 = vmatprep.subr.bf16.mxu0 0
    %171 = vmatpush1.bf16.msra.mxu0 0
    %172 = vmatprep.subr.bf16.mxu0 0
    %173 = vmatpush1.bf16.msra.mxu0 0
    %174 = vmatprep.subr.bf16.mxu0 0
    %175 = vmatpush1.bf16.msra.mxu0 0
    %176 = vmatprep.subr.bf16.mxu0 0
    %177 = vmatpush1.bf16.msra.mxu0 0
    %178 = vmatprep.subr.bf16.mxu0 0
    %179 = vmatpush1.bf16.msra.mxu0 0
    %180 = vmatprep.subr.bf16.mxu0 0
    %181 = vmatpush1.bf16.msra.mxu0 0
    %182 = vmatprep.subr.bf16.mxu0 0
    %183 = vmatpush1.bf16.msra.mxu0 0
    %184 = vmatprep.subr.bf16.mxu0 0
    %185 = vmatpush1.bf16.msra.mxu0 0
    %186 = vmatprep.subr.bf16.mxu0 0
    %187 = vmatpush1.bf16.msra.mxu0 0
    %188 = vmatprep.mubr.bf16.mxu0 0
    %189 = vmatmul.mubr.bf16.gmra.mrb[0].mxu0 %v145
    %v190 = vpop.f32.mrb[0].mxu0
    %v191 = vadd.f32 %v109, %v190
    %v192 = vpop.f32.mrb[0].mxu0
    %v193 = vpop.f32.mrb[0].mxu0
    %v194 = vadd.f32 %v109, %v193
    %v195 = vpop.f32.mrb[0].mxu0
    %196 = vmatprep.mubr.bf16.mxu0 0
    %197 = vmatmul.mubr.bf16.gmra.mrb[0].mxu0 %v148
    %v198 = vpop.f32.mrb[0].mxu0
    %v199 = vadd.f32 %v109, %v198
    %v200 = vpop.f32.mrb[0].mxu0
    %v201 = vpop.f32.mrb[0].mxu0
    %v202 = vadd.f32 %v109, %v201
    %v203 = vpop.f32.mrb[0].mxu0
    %204 = vmatprep.mubr.bf16.mxu0 0
    %205 = vmatmul.mubr.bf16.gmra.mrb[0].mxu0 %v151
    %v206 = vpop.f32.mrb[0].mxu0
    %v207 = vadd.f32 %v109, %v206
    %v208 = vpop.f32.mrb[0].mxu0
    %v209 = vpop.f32.mrb[0].mxu0
    %v210 = vadd.f32 %v109, %v209
    %v211 = vpop.f32.mrb[0].mxu0
    %212 = vmatprep.mubr.bf16.mxu0 0
    %213 = vmatmul.mubr.bf16.gmra.mrb[0].mxu0 %v154
    %v214 = vpop.f32.mrb[0].mxu0
    %v215 = vadd.f32 %v109, %v214
    %v216 = vpop.f32.mrb[0].mxu0
    %v217 = vpop.f32.mrb[0].mxu0
    %v218 = vadd.f32 %v109, %v217
    %v219 = vpop.f32.mrb[0].mxu0
    %220 = vdwg.mxu0
    %v221 = vmax.f32 %v191, 0.0
    %v222 = vmax.f32 %v194, 0.0
    %v223 = vmax.f32 %v199, 0.0
    %v224 = vmax.f32 %v202, 0.0
    %v225 = vmax.f32 %v207, 0.0
    %v226 = vmax.f32 %v210, 0.0
    %v227 = vmax.f32 %v215, 0.0
    %v228 = vmax.f32 %v218, 0.0
    %v229 = vpack.c.bf16 %v222, %v221
    %v230 = vpack.c.bf16 %v224, %v223
    %v231 = vpack.c.bf16 %v226, %v225
    %v232 = vpack.c.bf16 %v228, %v227
    %v233 = vld [vmem:[#allocation7] sm:$0xf]
    %v234 = vld [vmem:[#allocation7 + $0x4] sm:$0xf]
    %v235 = vld [vmem:[#allocation7 + $0x8] sm:$0xf]
    %v236 = vld [vmem:[#allocation7 + $0xc] sm:$0xf]
    %v237 = vld [vmem:[#allocation7 + $0x10] sm:$0xf]
    %v238 = vld [vmem:[#allocation7 + $0x14] sm:$0xf]
    %v239 = vld [vmem:[#allocation7 + $0x18] sm:$0xf]
    %v240 = vld [vmem:[#allocation7 + $0x1c] sm:$0xf]
    %v241 = vld [vmem:[#allocation7 + $0x20] sm:$0xf]
    %v242 = vld [vmem:[#allocation7 + $0x24] sm:$0xf]
    %v243 = vld [vmem:[#allocation7 + $0x28] sm:$0xf]
    %v244 = vld [vmem:[#allocation7 + $0x2c] sm:$0xf]
    %v245 = vld [vmem:[#allocation7 + $0x30] sm:$0xf]
    %v246 = vld [vmem:[#allocation7 + $0x34] sm:$0xf]
    %v247 = vld [vmem:[#allocation7 + $0x38] sm:$0xf]
    %v248 = vld [vmem:[#allocation7 + $0x3c] sm:$0xf]
    %v249 = vld [vmem:[%s5] sm:$0x1]
    %v251 = vlaneseq
    %v252 = vshrl.u32 %v251, 7
    %v253 = vsub.s32 0, %v252
    %v254 = vrot.slane %v249, %v253
    %v272 = vunpack.c.l.b16 %v233
    %v273 = vunpack.c.l.b16 %v234
    %v274 = vunpack.c.l.b16 %v235
    %v275 = vunpack.c.l.b16 %v236
    %v276 = vunpack.c.l.b16 %v237
    %v277 = vunpack.c.l.b16 %v238
    %v278 = vunpack.c.l.b16 %v239
    %v279 = vunpack.c.l.b16 %v240
    %v280 = vunpack.c.l.b16 %v241
    %v281 = vunpack.c.l.b16 %v242
    %v282 = vunpack.c.l.b16 %v243
    %v283 = vunpack.c.l.b16 %v244
    %v284 = vunpack.c.l.b16 %v245
    %v285 = vunpack.c.l.b16 %v246
    %v286 = vunpack.c.l.b16 %v247
    %v287 = vunpack.c.l.b16 %v248
    %v288 = vpack.c.b16 %v273, %v272
    %v289 = vpack.c.b16 %v275, %v274
    %v290 = vpack.c.b16 %v277, %v276
    %v291 = vpack.c.b16 %v279, %v278
    %v292 = vpack.c.b16 %v281, %v280
    %v293 = vpack.c.b16 %v283, %v282
    %v294 = vpack.c.b16 %v285, %v284
    %v295 = vpack.c.b16 %v287, %v286
    %304 = vmatprep.subr.bf16.mxu0 0
    %305 = vmatpush1.bf16.msra.mxu0 %v288
    %306 = vmatprep.subr.bf16.mxu0 0
    %307 = vmatpush1.bf16.msra.mxu0 %v289
    %308 = vmatprep.subr.bf16.mxu0 0
    %309 = vmatpush1.bf16.msra.mxu0 %v290
    %310 = vmatprep.subr.bf16.mxu0 0
    %311 = vmatpush1.bf16.msra.mxu0 %v291
    %312 = vmatprep.subr.bf16.mxu0 0
    %313 = vmatpush1.bf16.msra.mxu0 %v292
    %314 = vmatprep.subr.bf16.mxu0 0
    %315 = vmatpush1.bf16.msra.mxu0 %v293
    %316 = vmatprep.subr.bf16.mxu0 0
    %317 = vmatpush1.bf16.msra.mxu0 %v294
    %318 = vmatprep.subr.bf16.mxu0 0
    %319 = vmatpush1.bf16.msra.mxu0 %v295
    %320 = vmatprep.subr.bf16.mxu0 0
    %321 = vmatpush1.bf16.msra.mxu0 0
    %322 = vmatprep.subr.bf16.mxu0 0
    %323 = vmatpush1.bf16.msra.mxu0 0
    %324 = vmatprep.subr.bf16.mxu0 0
    %325 = vmatpush1.bf16.msra.mxu0 0
    %326 = vmatprep.subr.bf16.mxu0 0
    %327 = vmatpush1.bf16.msra.mxu0 0
    %328 = vmatprep.subr.bf16.mxu0 0
    %329 = vmatpush1.bf16.msra.mxu0 0
    %330 = vmatprep.subr.bf16.mxu0 0
    %331 = vmatpush1.bf16.msra.mxu0 0
    %332 = vmatprep.subr.bf16.mxu0 0
    %333 = vmatpush1.bf16.msra.mxu0 0
    %334 = vmatprep.subr.bf16.mxu0 0
    %335 = vmatpush1.bf16.msra.mxu0 0
    %336 = vmatprep.mubr.bf16.mxu0 0
    %337 = vmatmul.mubr.bf16.gmra.mrb[0].mxu0 %v229
    %v338 = vpop.f32.mrb[0].mxu0
    %v339 = vadd.f32 %v254, %v338
    %v340 = vpop.f32.mrb[0].mxu0
    %v341 = vpop.f32.mrb[0].mxu0
    %v342 = vadd.f32 %v254, %v341
    %v343 = vpop.f32.mrb[0].mxu0
    %344 = vmatprep.mubr.bf16.mxu0 0
    %345 = vmatmul.mubr.bf16.gmra.mrb[0].mxu0 %v230
    %v346 = vpop.f32.mrb[0].mxu0
    %v347 = vadd.f32 %v254, %v346
    %v348 = vpop.f32.mrb[0].mxu0
    %v349 = vpop.f32.mrb[0].mxu0
    %v350 = vadd.f32 %v254, %v349
    %v351 = vpop.f32.mrb[0].mxu0
    %352 = vmatprep.mubr.bf16.mxu0 0
    %353 = vmatmul.mubr.bf16.gmra.mrb[0].mxu0 %v231
    %v354 = vpop.f32.mrb[0].mxu0
    %v355 = vadd.f32 %v254, %v354
    %v356 = vpop.f32.mrb[0].mxu0
    %v357 = vpop.f32.mrb[0].mxu0
    %v358 = vadd.f32 %v254, %v357
    %v359 = vpop.f32.mrb[0].mxu0
    %360 = vmatprep.mubr.bf16.mxu0 0
    %361 = vmatmul.mubr.bf16.gmra.mrb[0].mxu0 %v232
    %v362 = vpop.f32.mrb[0].mxu0
    %v363 = vadd.f32 %v254, %v362
    %v364 = vpop.f32.mrb[0].mxu0
    %v365 = vpop.f32.mrb[0].mxu0
    %v366 = vadd.f32 %v254, %v365
    %v367 = vpop.f32.mrb[0].mxu0
    %368 = vdwg.mxu0
    %v369 = vmax.f32 %v339, 0.0
    %v370 = vmax.f32 %v342, 0.0
    %v371 = vmax.f32 %v347, 0.0
    %v372 = vmax.f32 %v350, 0.0
    %v373 = vmax.f32 %v355, 0.0
    %v374 = vmax.f32 %v358, 0.0
    %v375 = vmax.f32 %v363, 0.0
    %v376 = vmax.f32 %v366, 0.0
    %v377 = vld [vmem:[#allocation2] sm:$0xf]
    %v378 = vld [vmem:[#allocation2 + $0x4] sm:$0xf]
    %v379 = vld [vmem:[#allocation2 + $0x8] sm:$0xf]
    %v380 = vld [vmem:[#allocation2 + $0xc] sm:$0xf]
    %v381 = vld [vmem:[#allocation2 + $0x10] sm:$0xf]
    %v382 = vld [vmem:[#allocation2 + $0x14] sm:$0xf]
    %v383 = vld [vmem:[#allocation2 + $0x18] sm:$0xf]
    %v384 = vld [vmem:[#allocation2 + $0x1c] sm:$0xf]
    %v385 = vld [vmem:[%s6] sm:$0xf]
    %v386 = vld [vmem:[%s6 + $0x4] sm:$0xf]
    %v387 = vld [vmem:[%s6 + $0x8] sm:$0xf]
    %v388 = vld [vmem:[%s6 + $0xc] sm:$0xf]
    %v389 = vld [vmem:[%s6 + $0x10] sm:$0xf]
    %v390 = vld [vmem:[%s6 + $0x14] sm:$0xf]
    %v391 = vld [vmem:[%s6 + $0x18] sm:$0xf]
    %v392 = vld [vmem:[%s6 + $0x1c] sm:$0xf]
    %v393 = vld [vmem:[%s6 + $0x20] sm:$0xf]
    %v394 = vld [vmem:[%s6 + $0x24] sm:$0xf]
    %v395 = vld [vmem:[%s6 + $0x28] sm:$0xf]
    %v396 = vld [vmem:[%s6 + $0x2c] sm:$0xf]
    %v397 = vld [vmem:[%s6 + $0x30] sm:$0xf]
    %v398 = vld [vmem:[%s6 + $0x34] sm:$0xf]
    %v399 = vld [vmem:[%s6 + $0x38] sm:$0xf]
    %v400 = vld [vmem:[%s6 + $0x3c] sm:$0xf]
    %v401 = vld [vmem:[%s7] sm:$0x1]
    %v402 = vpack.c.bf16 %v370, %v369
    %v403 = vpack.c.bf16 %v372, %v371
    %v404 = vpack.c.bf16 %v374, %v373
    %v405 = vpack.c.bf16 %v376, %v375
    %v407 = vlaneseq
    %v408 = vshrl.u32 %v407, 7
    %v409 = vsub.s32 0, %v408
    %v410 = vrot.slane %v401, %v409
    %v428 = vunpack.c.l.b16 %v385
    %v429 = vunpack.c.l.b16 %v386
    %v430 = vunpack.c.l.b16 %v387
    %v431 = vunpack.c.l.b16 %v388
    %v432 = vunpack.c.l.b16 %v389
    %v433 = vunpack.c.l.b16 %v390
    %v434 = vunpack.c.l.b16 %v391
    %v435 = vunpack.c.l.b16 %v392
    %v436 = vunpack.c.l.b16 %v393
    %v437 = vunpack.c.l.b16 %v394
    %v438 = vunpack.c.l.b16 %v395
    %v439 = vunpack.c.l.b16 %v396
    %v440 = vunpack.c.l.b16 %v397
    %v441 = vunpack.c.l.b16 %v398
    %v442 = vunpack.c.l.b16 %v399
    %v443 = vunpack.c.l.b16 %v400
    %v444 = vpack.c.b16 %v429, %v428
    %v445 = vpack.c.b16 %v431, %v430
    %v446 = vpack.c.b16 %v433, %v432
    %v447 = vpack.c.b16 %v435, %v434
    %v448 = vpack.c.b16 %v437, %v436
    %v449 = vpack.c.b16 %v439, %v438
    %v450 = vpack.c.b16 %v441, %v440
    %v451 = vpack.c.b16 %v443, %v442
    %460 = vmatprep.subr.bf16.mxu0 0
    %461 = vmatpush1.bf16.msra.mxu0 %v444
    %462 = vmatprep.subr.bf16.mxu0 0
    %463 = vmatpush1.bf16.msra.mxu0 %v445
    %464 = vmatprep.subr.bf16.mxu0 0
    %465 = vmatpush1.bf16.msra.mxu0 %v446
    %466 = vmatprep.subr.bf16.mxu0 0
    %467 = vmatpush1.bf16.msra.mxu0 %v447
    %468 = vmatprep.subr.bf16.mxu0 0
    %469 = vmatpush1.bf16.msra.mxu0 %v448
    %470 = vmatprep.subr.bf16.mxu0 0
    %471 = vmatpush1.bf16.msra.mxu0 %v449
    %472 = vmatprep.subr.bf16.mxu0 0
    %473 = vmatpush1.bf16.msra.mxu0 %v450
    %474 = vmatprep.subr.bf16.mxu0 0
    %475 = vmatpush1.bf16.msra.mxu0 %v451
    %476 = vmatprep.subr.bf16.mxu0 0
    %477 = vmatpush1.bf16.msra.mxu0 0
    %478 = vmatprep.subr.bf16.mxu0 0
    %479 = vmatpush1.bf16.msra.mxu0 0
    %480 = vmatprep.subr.bf16.mxu0 0
    %481 = vmatpush1.bf16.msra.mxu0 0
    %482 = vmatprep.subr.bf16.mxu0 0
    %483 = vmatpush1.bf16.msra.mxu0 0
    %484 = vmatprep.subr.bf16.mxu0 0
    %485 = vmatpush1.bf16.msra.mxu0 0
    %486 = vmatprep.subr.bf16.mxu0 0
    %487 = vmatpush1.bf16.msra.mxu0 0
    %488 = vmatprep.subr.bf16.mxu0 0
    %489 = vmatpush1.bf16.msra.mxu0 0
    %490 = vmatprep.subr.bf16.mxu0 0
    %491 = vmatpush1.bf16.msra.mxu0 0
    %492 = vmatprep.mubr.bf16.mxu0 0
    %493 = vmatmul.mubr.bf16.gmra.mrb[0].mxu0 %v402
    %v494 = vpop.f32.mrb[0].mxu0
    %v495 = vadd.f32 %v410, %v494
    %v496 = vpop.f32.mrb[0].mxu0
    %v497 = vpop.f32.mrb[0].mxu0
    %v498 = vadd.f32 %v410, %v497
    %v499 = vpop.f32.mrb[0].mxu0
    %500 = vmatprep.mubr.bf16.mxu0 0
    %501 = vmatmul.mubr.bf16.gmra.mrb[0].mxu0 %v403
    %v502 = vpop.f32.mrb[0].mxu0
    %v503 = vadd.f32 %v410, %v502
    %v504 = vpop.f32.mrb[0].mxu0
    %v505 = vpop.f32.mrb[0].mxu0
    %v506 = vadd.f32 %v410, %v505
    %v507 = vpop.f32.mrb[0].mxu0
    %508 = vmatprep.mubr.bf16.mxu0 0
    %509 = vmatmul.mubr.bf16.gmra.mrb[0].mxu0 %v404
    %v510 = vpop.f32.mrb[0].mxu0
    %v511 = vadd.f32 %v410, %v510
    %v512 = vpop.f32.mrb[0].mxu0
    %v513 = vpop.f32.mrb[0].mxu0
    %v514 = vadd.f32 %v410, %v513
    %v515 = vpop.f32.mrb[0].mxu0
    %516 = vmatprep.mubr.bf16.mxu0 0
    %517 = vmatmul.mubr.bf16.gmra.mrb[0].mxu0 %v405
    %v518 = vpop.f32.mrb[0].mxu0
    %v519 = vadd.f32 %v410, %v518
    %v520 = vpop.f32.mrb[0].mxu0
    %v521 = vpop.f32.mrb[0].mxu0
    %v522 = vadd.f32 %v410, %v521
    %v523 = vpop.f32.mrb[0].mxu0
    %524 = vdwg.mxu0
    %v525 = vpack.c.bf16 %v498, %v495
    %v526 = vpack.c.bf16 %v506, %v503
    %v527 = vpack.c.bf16 %v514, %v511
    %v528 = vpack.c.bf16 %v522, %v519
    %v537 = vunpack.c.l.b16 %v377
    %v538 = vunpack.c.l.b16 %v378
    %v539 = vunpack.c.l.b16 %v379
    %v540 = vunpack.c.l.b16 %v380
    %v541 = vunpack.c.l.b16 %v381
    %v542 = vunpack.c.l.b16 %v382
    %v543 = vunpack.c.l.b16 %v383
    %v544 = vunpack.c.l.b16 %v384
    %v545 = vpack.c.b16 %v538, %v537
    %v546 = vpack.c.b16 %v540, %v539
    %v547 = vpack.c.b16 %v542, %v541
    %v548 = vpack.c.b16 %v544, %v543
    %vm549 = vcmask 523264
    %v551 = vsel %vm549, %v545, 0
    %v554 = vsel %vm549, %v546, 0
    %v557 = vsel %vm549, %v547, 0
    %v560 = vsel %vm549, %v548, 0
    %562 = vmatprep.subr.bf16.mxu0 0
    %563 = vmatpush1.bf16.msra.mxu0 %v525
    %564 = vmatprep.subr.bf16.mxu0 0
    %565 = vmatpush1.bf16.msra.mxu0 %v526
    %566 = vmatprep.subr.bf16.mxu0 0
    %567 = vmatpush1.bf16.msra.mxu0 %v527
    %568 = vmatprep.subr.bf16.mxu0 0
    %569 = vmatpush1.bf16.msra.mxu0 %v528
    %570 = vmatprep.subr.bf16.mxu0 0
    %571 = vmatpush1.bf16.msra.mxu0 0
    %572 = vmatprep.subr.bf16.mxu0 0
    %573 = vmatpush1.bf16.msra.mxu0 0
    %574 = vmatprep.subr.bf16.mxu0 0
    %575 = vmatpush1.bf16.msra.mxu0 0
    %576 = vmatprep.subr.bf16.mxu0 0
    %577 = vmatpush1.bf16.msra.mxu0 0
    %578 = vmatprep.subr.bf16.mxu0 0
    %579 = vmatpush1.bf16.msra.mxu0 0
    %580 = vmatprep.subr.bf16.mxu0 0
    %581 = vmatpush1.bf16.msra.mxu0 0
    %582 = vmatprep.subr.bf16.mxu0 0
    %583 = vmatpush1.bf16.msra.mxu0 0
    %584 = vmatprep.subr.bf16.mxu0 0
    %585 = vmatpush1.bf16.msra.mxu0 0
    %586 = vmatprep.subr.bf16.mxu0 0
    %587 = vmatpush1.bf16.msra.mxu0 0
    %588 = vmatprep.subr.bf16.mxu0 0
    %589 = vmatpush1.bf16.msra.mxu0 0
    %590 = vmatprep.subr.bf16.mxu0 0
    %591 = vmatpush1.bf16.msra.mxu0 0
    %592 = vmatprep.subr.bf16.mxu0 0
    %593 = vmatpush1.bf16.msra.mxu0 0
    %594 = vmatprep.mubr.bf16.mxu0 0
    %595 = vmatmul.mubr.bf16.gmra.mrb[0].mxu0 %v551
    %v596 = vpop.f32.mrb[0].mxu0
    %v597 = vadd.f32 0.0, %v596
    %v598 = vpop.f32.mrb[0].mxu0
    %v599 = vpop.f32.mrb[0].mxu0
    %v600 = vadd.f32 0.0, %v599
    %v601 = vpop.f32.mrb[0].mxu0
    %602 = vmatprep.mubr.bf16.mxu0 0
    %603 = vmatmul.mubr.bf16.gmra.mrb[0].mxu0 %v554
    %v604 = vpop.f32.mrb[0].mxu0
    %v605 = vadd.f32 0.0, %v604
    %v606 = vpop.f32.mrb[0].mxu0
    %v607 = vpop.f32.mrb[0].mxu0
    %v608 = vadd.f32 0.0, %v607
    %v609 = vpop.f32.mrb[0].mxu0
    %610 = vmatprep.mubr.bf16.mxu0 0
    %611 = vmatmul.mubr.bf16.gmra.mrb[0].mxu0 %v557
    %v612 = vpop.f32.mrb[0].mxu0
    %v613 = vadd.f32 0.0, %v612
    %v614 = vpop.f32.mrb[0].mxu0
    %v615 = vpop.f32.mrb[0].mxu0
    %v616 = vadd.f32 0.0, %v615
    %v617 = vpop.f32.mrb[0].mxu0
    %618 = vmatprep.mubr.bf16.mxu0 0
    %619 = vmatmul.mubr.bf16.gmra.mrb[0].mxu0 %v560
    %v620 = vpop.f32.mrb[0].mxu0
    %v621 = vadd.f32 0.0, %v620
    %v622 = vpop.f32.mrb[0].mxu0
    %v623 = vpop.f32.mrb[0].mxu0
    %v624 = vadd.f32 0.0, %v623
    %v625 = vpop.f32.mrb[0].mxu0
    %626 = vdwg.mxu0
    %v627 = vadd.f32 %v369, %v597
    %v628 = vadd.f32 %v370, %v600
    %v629 = vadd.f32 %v371, %v605
    %v630 = vadd.f32 %v372, %v608
    %v631 = vadd.f32 %v373, %v613
    %v632 = vadd.f32 %v374, %v616
    %v633 = vadd.f32 %v375, %v621
    %v634 = vadd.f32 %v376, %v624
    %v635 = vpack.c.bf16 %v628, %v627
    %v636 = vpack.c.bf16 %v630, %v629
    %v637 = vpack.c.bf16 %v632, %v631
    %v638 = vpack.c.bf16 %v634, %v633
    %639 = vmatprep.subr.bf16.mxu0 0
    %640 = vmatpush1.bf16.msra.mxu0 %v444
    %641 = vmatprep.subr.bf16.mxu0 0
    %642 = vmatpush1.bf16.msra.mxu0 %v445
    %643 = vmatprep.subr.bf16.mxu0 0
    %644 = vmatpush1.bf16.msra.mxu0 %v446
    %645 = vmatprep.subr.bf16.mxu0 0
    %646 = vmatpush1.bf16.msra.mxu0 %v447
    %647 = vmatprep.subr.bf16.mxu0 0
    %648 = vmatpush1.bf16.msra.mxu0 %v448
    %649 = vmatprep.subr.bf16.mxu0 0
    %650 = vmatpush1.bf16.msra.mxu0 %v449
    %651 = vmatprep.subr.bf16.mxu0 0
    %652 = vmatpush1.bf16.msra.mxu0 %v450
    %653 = vmatprep.subr.bf16.mxu0 0
    %654 = vmatpush1.bf16.msra.mxu0 %v451
    %655 = vmatprep.subr.bf16.mxu0 0
    %656 = vmatpush1.bf16.msra.mxu0 0
    %657 = vmatprep.subr.bf16.mxu0 0
    %658 = vmatpush1.bf16.msra.mxu0 0
    %659 = vmatprep.subr.bf16.mxu0 0
    %660 = vmatpush1.bf16.msra.mxu0 0
    %661 = vmatprep.subr.bf16.mxu0 0
    %662 = vmatpush1.bf16.msra.mxu0 0
    %663 = vmatprep.subr.bf16.mxu0 0
    %664 = vmatpush1.bf16.msra.mxu0 0
    %665 = vmatprep.subr.bf16.mxu0 0
    %666 = vmatpush1.bf16.msra.mxu0 0
    %667 = vmatprep.subr.bf16.mxu0 0
    %668 = vmatpush1.bf16.msra.mxu0 0
    %669 = vmatprep.subr.bf16.mxu0 0
    %670 = vmatpush1.bf16.msra.mxu0 0
    %671 = vmatprep.mubr.bf16.mxu0 0
    %672 = vmatmul.mubr.bf16.gmra.mrb[0].mxu0 %v635
    %v673 = vpop.f32.mrb[0].mxu0
    %v674 = vadd.f32 %v410, %v673
    %v675 = vpop.f32.mrb[0].mxu0
    %v676 = vpop.f32.mrb[0].mxu0
    %v677 = vadd.f32 %v410, %v676
    %v678 = vpop.f32.mrb[0].mxu0
    %679 = vmatprep.mubr.bf16.mxu0 0
    %680 = vmatmul.mubr.bf16.gmra.mrb[0].mxu0 %v636
    %v681 = vpop.f32.mrb[0].mxu0
    %v682 = vadd.f32 %v410, %v681
    %v683 = vpop.f32.mrb[0].mxu0
    %v684 = vpop.f32.mrb[0].mxu0
    %v685 = vadd.f32 %v410, %v684
    %v686 = vpop.f32.mrb[0].mxu0
    %687 = vmatprep.mubr.bf16.mxu0 0
    %688 = vmatmul.mubr.bf16.gmra.mrb[0].mxu0 %v637
    %v689 = vpop.f32.mrb[0].mxu0
    %v690 = vadd.f32 %v410, %v689
    %v691 = vpop.f32.mrb[0].mxu0
    %v692 = vpop.f32.mrb[0].mxu0
    %v693 = vadd.f32 %v410, %v692
    %v694 = vpop.f32.mrb[0].mxu0
    %695 = vmatprep.mubr.bf16.mxu0 0
    %696 = vmatmul.mubr.bf16.gmra.mrb[0].mxu0 %v638
    %v697 = vpop.f32.mrb[0].mxu0
    %v698 = vadd.f32 %v410, %v697
    %v699 = vpop.f32.mrb[0].mxu0
    %v700 = vpop.f32.mrb[0].mxu0
    %v701 = vadd.f32 %v410, %v700
    %v702 = vpop.f32.mrb[0].mxu0
    %703 = vdwg.mxu0
    %v704 = vpack.c.bf16 %v677, %v674
    %v705 = vpack.c.bf16 %v685, %v682
    %v706 = vpack.c.bf16 %v693, %v690
    %v707 = vpack.c.bf16 %v701, %v698
    %708 = vmatprep.subr.bf16.mxu0 0
    %709 = vmatpush1.bf16.msra.mxu0 %v704
    %710 = vmatprep.subr.bf16.mxu0 0
    %711 = vmatpush1.bf16.msra.mxu0 %v705
    %712 = vmatprep.subr.bf16.mxu0 0
    %713 = vmatpush1.bf16.msra.mxu0 %v706
    %714 = vmatprep.subr.bf16.mxu0 0
    %715 = vmatpush1.bf16.msra.mxu0 %v707
    %716 = vmatprep.subr.bf16.mxu0 0
    %717 = vmatpush1.bf16.msra.mxu0 0
    %718 = vmatprep.subr.bf16.mxu0 0
    %719 = vmatpush1.bf16.msra.mxu0 0
    %720 = vmatprep.subr.bf16.mxu0 0
    %721 = vmatpush1.bf16.msra.mxu0 0
    %722 = vmatprep.subr.bf16.mxu0 0
    %723 = vmatpush1.bf16.msra.mxu0 0
    %724 = vmatprep.subr.bf16.mxu0 0
    %725 = vmatpush1.bf16.msra.mxu0 0
    %726 = vmatprep.subr.bf16.mxu0 0
    %727 = vmatpush1.bf16.msra.mxu0 0
    %728 = vmatprep.subr.bf16.mxu0 0
    %729 = vmatpush1.bf16.msra.mxu0 0
    %730 = vmatprep.subr.bf16.mxu0 0
    %731 = vmatpush1.bf16.msra.mxu0 0
    %732 = vmatprep.subr.bf16.mxu0 0
    %733 = vmatpush1.bf16.msra.mxu0 0
    %734 = vmatprep.subr.bf16.mxu0 0
    %735 = vmatpush1.bf16.msra.mxu0 0
    %736 = vmatprep.subr.bf16.mxu0 0
    %737 = vmatpush1.bf16.msra.mxu0 0
    %738 = vmatprep.subr.bf16.mxu0 0
    %739 = vmatpush1.bf16.msra.mxu0 0
    %740 = vmatprep.mubr.bf16.mxu0 0
    %741 = vmatmul.mubr.bf16.gmra.mrb[0].mxu0 %v551
    %v742 = vpop.f32.mrb[0].mxu0
    %v743 = vadd.f32 0.0, %v742
    %v744 = vpop.f32.mrb[0].mxu0
    %v745 = vpop.f32.mrb[0].mxu0
    %v746 = vadd.f32 0.0, %v745
    %v747 = vpop.f32.mrb[0].mxu0
    %748 = vmatprep.mubr.bf16.mxu0 0
    %749 = vmatmul.mubr.bf16.gmra.mrb[0].mxu0 %v554
    %v750 = vpop.f32.mrb[0].mxu0
    %v751 = vadd.f32 0.0, %v750
    %v752 = vpop.f32.mrb[0].mxu0
    %v753 = vpop.f32.mrb[0].mxu0
    %v754 = vadd.f32 0.0, %v753
    %v755 = vpop.f32.mrb[0].mxu0
    %756 = vmatprep.mubr.bf16.mxu0 0
    %757 = vmatmul.mubr.bf16.gmra.mrb[0].mxu0 %v557
    %v758 = vpop.f32.mrb[0].mxu0
    %v759 = vadd.f32 0.0, %v758
    %v760 = vpop.f32.mrb[0].mxu0
    %v761 = vpop.f32.mrb[0].mxu0
    %v762 = vadd.f32 0.0, %v761
    %v763 = vpop.f32.mrb[0].mxu0
    %764 = vmatprep.mubr.bf16.mxu0 0
    %765 = vmatmul.mubr.bf16.gmra.mrb[0].mxu0 %v560
    %v766 = vpop.f32.mrb[0].mxu0
    %v767 = vadd.f32 0.0, %v766
    %v768 = vpop.f32.mrb[0].mxu0
    %v769 = vpop.f32.mrb[0].mxu0
    %v770 = vadd.f32 0.0, %v769
    %v771 = vpop.f32.mrb[0].mxu0
    %772 = vdwg.mxu0
    %v773 = vadd.f32 %v627, %v743
    %v774 = vadd.f32 %v628, %v746
    %v775 = vadd.f32 %v629, %v751
    %v776 = vadd.f32 %v630, %v754
    %v777 = vadd.f32 %v631, %v759
    %v778 = vadd.f32 %v632, %v762
    %v779 = vadd.f32 %v633, %v767
    %v780 = vadd.f32 %v634, %v770
    %v781 = vpack.c.bf16 %v774, %v773
    %v782 = vpack.c.bf16 %v776, %v775
    %v783 = vpack.c.bf16 %v778, %v777
    %v784 = vpack.c.bf16 %v780, %v779
    %785 = vmatprep.subr.bf16.mxu0 0
    %786 = vmatpush1.bf16.msra.mxu0 %v444
    %787 = vmatprep.subr.bf16.mxu0 0
    %788 = vmatpush1.bf16.msra.mxu0 %v445
    %789 = vmatprep.subr.bf16.mxu0 0
    %790 = vmatpush1.bf16.msra.mxu0 %v446
    %791 = vmatprep.subr.bf16.mxu0 0
    %792 = vmatpush1.bf16.msra.mxu0 %v447
    %793 = vmatprep.subr.bf16.mxu0 0
    %794 = vmatpush1.bf16.msra.mxu0 %v448
    %795 = vmatprep.subr.bf16.mxu0 0
    %796 = vmatpush1.bf16.msra.mxu0 %v449
    %797 = vmatprep.subr.bf16.mxu0 0
    %798 = vmatpush1.bf16.msra.mxu0 %v450
    %799 = vmatprep.subr.bf16.mxu0 0
    %800 = vmatpush1.bf16.msra.mxu0 %v451
    %801 = vmatprep.subr.bf16.mxu0 0
    %802 = vmatpush1.bf16.msra.mxu0 0
    %803 = vmatprep.subr.bf16.mxu0 0
    %804 = vmatpush1.bf16.msra.mxu0 0
    %805 = vmatprep.subr.bf16.mxu0 0
    %806 = vmatpush1.bf16.msra.mxu0 0
    %807 = vmatprep.subr.bf16.mxu0 0
    %808 = vmatpush1.bf16.msra.mxu0 0
    %809 = vmatprep.subr.bf16.mxu0 0
    %810 = vmatpush1.bf16.msra.mxu0 0
    %811 = vmatprep.subr.bf16.mxu0 0
    %812 = vmatpush1.bf16.msra.mxu0 0
    %813 = vmatprep.subr.bf16.mxu0 0
    %814 = vmatpush1.bf16.msra.mxu0 0
    %815 = vmatprep.subr.bf16.mxu0 0
    %816 = vmatpush1.bf16.msra.mxu0 0
    %817 = vmatprep.mubr.bf16.mxu0 0
    %818 = vmatmul.mubr.bf16.gmra.mrb[0].mxu0 %v781
    %v819 = vpop.f32.mrb[0].mxu0
    %v820 = vadd.f32 %v410, %v819
    %v821 = vpop.f32.mrb[0].mxu0
    %v822 = vpop.f32.mrb[0].mxu0
    %v823 = vadd.f32 %v410, %v822
    %v824 = vpop.f32.mrb[0].mxu0
    %825 = vmatprep.mubr.bf16.mxu0 0
    %826 = vmatmul.mubr.bf16.gmra.mrb[0].mxu0 %v782
    %v827 = vpop.f32.mrb[0].mxu0
    %v828 = vadd.f32 %v410, %v827
    %v829 = vpop.f32.mrb[0].mxu0
    %v830 = vpop.f32.mrb[0].mxu0
    %v831 = vadd.f32 %v410, %v830
    %v832 = vpop.f32.mrb[0].mxu0
    %833 = vmatprep.mubr.bf16.mxu0 0
    %834 = vmatmul.mubr.bf16.gmra.mrb[0].mxu0 %v783
    %v835 = vpop.f32.mrb[0].mxu0
    %v836 = vadd.f32 %v410, %v835
    %v837 = vpop.f32.mrb[0].mxu0
    %v838 = vpop.f32.mrb[0].mxu0
    %v839 = vadd.f32 %v410, %v838
    %v840 = vpop.f32.mrb[0].mxu0
    %841 = vmatprep.mubr.bf16.mxu0 0
    %842 = vmatmul.mubr.bf16.gmra.mrb[0].mxu0 %v784
    %v843 = vpop.f32.mrb[0].mxu0
    %v844 = vadd.f32 %v410, %v843
    %v845 = vpop.f32.mrb[0].mxu0
    %v846 = vpop.f32.mrb[0].mxu0
    %v847 = vadd.f32 %v410, %v846
    %v848 = vpop.f32.mrb[0].mxu0
    %849 = vdwg.mxu0
    %v850 = vpack.c.bf16 %v823, %v820
    %v851 = vpack.c.bf16 %v831, %v828
    %v852 = vpack.c.bf16 %v839, %v836
    %v853 = vpack.c.bf16 %v847, %v844
    %854 = vmatprep.subr.bf16.mxu0 0
    %855 = vmatpush1.bf16.msra.mxu0 %v850
    %856 = vmatprep.subr.bf16.mxu0 0
    %857 = vmatpush1.bf16.msra.mxu0 %v851
    %858 = vmatprep.subr.bf16.mxu0 0
    %859 = vmatpush1.bf16.msra.mxu0 %v852
    %860 = vmatprep.subr.bf16.mxu0 0
    %861 = vmatpush1.bf16.msra.mxu0 %v853
    %862 = vmatprep.subr.bf16.mxu0 0
    %863 = vmatpush1.bf16.msra.mxu0 0
    %864 = vmatprep.subr.bf16.mxu0 0
    %865 = vmatpush1.bf16.msra.mxu0 0
    %866 = vmatprep.subr.bf16.mxu0 0
    %867 = vmatpush1.bf16.msra.mxu0 0
    %868 = vmatprep.subr.bf16.mxu0 0
    %869 = vmatpush1.bf16.msra.mxu0 0
    %870 = vmatprep.subr.bf16.mxu0 0
    %871 = vmatpush1.bf16.msra.mxu0 0
    %872 = vmatprep.subr.bf16.mxu0 0
    %873 = vmatpush1.bf16.msra.mxu0 0
    %874 = vmatprep.subr.bf16.mxu0 0
    %875 = vmatpush1.bf16.msra.mxu0 0
    %876 = vmatprep.subr.bf16.mxu0 0
    %877 = vmatpush1.bf16.msra.mxu0 0
    %878 = vmatprep.subr.bf16.mxu0 0
    %879 = vmatpush1.bf16.msra.mxu0 0
    %880 = vmatprep.subr.bf16.mxu0 0
    %881 = vmatpush1.bf16.msra.mxu0 0
    %882 = vmatprep.subr.bf16.mxu0 0
    %883 = vmatpush1.bf16.msra.mxu0 0
    %884 = vmatprep.subr.bf16.mxu0 0
    %885 = vmatpush1.bf16.msra.mxu0 0
    %886 = vmatprep.mubr.bf16.mxu0 0
    %887 = vmatmul.mubr.bf16.gmra.mrb[0].mxu0 %v551
    %v888 = vpop.f32.mrb[0].mxu0
    %v889 = vadd.f32 0.0, %v888
    %v890 = vpop.f32.mrb[0].mxu0
    %v891 = vpop.f32.mrb[0].mxu0
    %v892 = vadd.f32 0.0, %v891
    %v893 = vpop.f32.mrb[0].mxu0
    %894 = vmatprep.mubr.bf16.mxu0 0
    %895 = vmatmul.mubr.bf16.gmra.mrb[0].mxu0 %v554
    %v896 = vpop.f32.mrb[0].mxu0
    %v897 = vadd.f32 0.0, %v896
    %v898 = vpop.f32.mrb[0].mxu0
    %v899 = vpop.f32.mrb[0].mxu0
    %v900 = vadd.f32 0.0, %v899
    %v901 = vpop.f32.mrb[0].mxu0
    %902 = vmatprep.mubr.bf16.mxu0 0
    %903 = vmatmul.mubr.bf16.gmra.mrb[0].mxu0 %v557
    %v904 = vpop.f32.mrb[0].mxu0
    %v905 = vadd.f32 0.0, %v904
    %v906 = vpop.f32.mrb[0].mxu0
    %v907 = vpop.f32.mrb[0].mxu0
    %v908 = vadd.f32 0.0, %v907
    %v909 = vpop.f32.mrb[0].mxu0
    %910 = vmatprep.mubr.bf16.mxu0 0
    %911 = vmatmul.mubr.bf16.gmra.mrb[0].mxu0 %v560
    %v912 = vpop.f32.mrb[0].mxu0
    %v913 = vadd.f32 0.0, %v912
    %v914 = vpop.f32.mrb[0].mxu0
    %v915 = vpop.f32.mrb[0].mxu0
    %v916 = vadd.f32 0.0, %v915
    %v917 = vpop.f32.mrb[0].mxu0
    %918 = vdwg.mxu0
    %v919 = vadd.f32 %v773, %v889
    %v920 = vadd.f32 %v774, %v892
    %v921 = vadd.f32 %v775, %v897
    %v922 = vadd.f32 %v776, %v900
    %v923 = vadd.f32 %v777, %v905
    %v924 = vadd.f32 %v778, %v908
    %v925 = vadd.f32 %v779, %v913
    %v926 = vadd.f32 %v780, %v916
    %v927 = vpack.c.bf16 %v920, %v919
    %v928 = vpack.c.bf16 %v922, %v921
    %v929 = vpack.c.bf16 %v924, %v923
    %v930 = vpack.c.bf16 %v926, %v925
    %v931 = vld [vmem:[#allocation8] sm:$0xf]
    %v932 = vld [vmem:[#allocation8 + $0x4] sm:$0xf]
    %v933 = vld [vmem:[#allocation8 + $0x8] sm:$0xf]
    %v934 = vld [vmem:[#allocation8 + $0xc] sm:$0xf]
    %v935 = vld [vmem:[#allocation8 + $0x10] sm:$0xf]
    %v936 = vld [vmem:[#allocation8 + $0x14] sm:$0xf]
    %v937 = vld [vmem:[#allocation8 + $0x18] sm:$0xf]
    %v938 = vld [vmem:[#allocation8 + $0x1c] sm:$0xf]
    %v939 = vld [vmem:[#allocation8 + $0x20] sm:$0xf]
    %v940 = vld [vmem:[#allocation8 + $0x24] sm:$0xf]
    %v941 = vld [vmem:[#allocation8 + $0x28] sm:$0xf]
    %v942 = vld [vmem:[#allocation8 + $0x2c] sm:$0xf]
    %v943 = vld [vmem:[#allocation8 + $0x30] sm:$0xf]
    %v944 = vld [vmem:[#allocation8 + $0x34] sm:$0xf]
    %v945 = vld [vmem:[#allocation8 + $0x38] sm:$0xf]
    %v946 = vld [vmem:[#allocation8 + $0x3c] sm:$0xf]
    %v947 = vld [vmem:[%s9] sm:$0x1]
    %v949 = vlaneseq
    %v950 = vshrl.u32 %v949, 7
    %v951 = vsub.s32 0, %v950
    %v952 = vrot.slane %v947, %v951
    %v970 = vunpack.c.l.b16 %v931
    %v971 = vunpack.c.l.b16 %v932
    %v972 = vunpack.c.l.b16 %v933
    %v973 = vunpack.c.l.b16 %v934
    %v974 = vunpack.c.l.b16 %v935
    %v975 = vunpack.c.l.b16 %v936
    %v976 = vunpack.c.l.b16 %v937
    %v977 = vunpack.c.l.b16 %v938
    %v978 = vunpack.c.l.b16 %v939
    %v979 = vunpack.c.l.b16 %v940
    %v980 = vunpack.c.l.b16 %v941
    %v981 = vunpack.c.l.b16 %v942
    %v982 = vunpack.c.l.b16 %v943
    %v983 = vunpack.c.l.b16 %v944
    %v984 = vunpack.c.l.b16 %v945
    %v985 = vunpack.c.l.b16 %v946
    %v986 = vpack.c.b16 %v971, %v970
    %v987 = vpack.c.b16 %v973, %v972
    %v988 = vpack.c.b16 %v975, %v974
    %v989 = vpack.c.b16 %v977, %v976
    %v990 = vpack.c.b16 %v979, %v978
    %v991 = vpack.c.b16 %v981, %v980
    %v992 = vpack.c.b16 %v983, %v982
    %v993 = vpack.c.b16 %v985, %v984
    %1002 = vmatprep.subr.bf16.mxu0 0
    %1003 = vmatpush1.bf16.msra.mxu0 %v986
    %1004 = vmatprep.subr.bf16.mxu0 0
    %1005 = vmatpush1.bf16.msra.mxu0 %v987
    %1006 = vmatprep.subr.bf16.mxu0 0
    %1007 = vmatpush1.bf16.msra.mxu0 %v988
    %1008 = vmatprep.subr.bf16.mxu0 0
    %1009 = vmatpush1.bf16.msra.mxu0 %v989
    %1010 = vmatprep.subr.bf16.mxu0 0
    %1011 = vmatpush1.bf16.msra.mxu0 %v990
    %1012 = vmatprep.subr.bf16.mxu0 0
    %1013 = vmatpush1.bf16.msra.mxu0 %v991
    %1014 = vmatprep.subr.bf16.mxu0 0
    %1015 = vmatpush1.bf16.msra.mxu0 %v992
    %1016 = vmatprep.subr.bf16.mxu0 0
    %1017 = vmatpush1.bf16.msra.mxu0 %v993
    %1018 = vmatprep.subr.bf16.mxu0 0
    %1019 = vmatpush1.bf16.msra.mxu0 0
    %1020 = vmatprep.subr.bf16.mxu0 0
    %1021 = vmatpush1.bf16.msra.mxu0 0
    %1022 = vmatprep.subr.bf16.mxu0 0
    %1023 = vmatpush1.bf16.msra.mxu0 0
    %1024 = vmatprep.subr.bf16.mxu0 0
    %1025 = vmatpush1.bf16.msra.mxu0 0
    %1026 = vmatprep.subr.bf16.mxu0 0
    %1027 = vmatpush1.bf16.msra.mxu0 0
    %1028 = vmatprep.subr.bf16.mxu0 0
    %1029 = vmatpush1.bf16.msra.mxu0 0
    %1030 = vmatprep.subr.bf16.mxu0 0
    %1031 = vmatpush1.bf16.msra.mxu0 0
    %1032 = vmatprep.subr.bf16.mxu0 0
    %1033 = vmatpush1.bf16.msra.mxu0 0
    %1034 = vmatprep.mubr.bf16.mxu0 0
    %1035 = vmatmul.mubr.bf16.gmra.mrb[0].mxu0 %v927
    %v1036 = vpop.f32.mrb[0].mxu0
    %v1037 = vadd.f32 %v952, %v1036
    %v1038 = vpop.f32.mrb[0].mxu0
    %v1039 = vpop.f32.mrb[0].mxu0
    %v1040 = vadd.f32 %v952, %v1039
    %v1041 = vpop.f32.mrb[0].mxu0
    %1042 = vmatprep.mubr.bf16.mxu0 0
    %1043 = vmatmul.mubr.bf16.gmra.mrb[0].mxu0 %v928
    %v1044 = vpop.f32.mrb[0].mxu0
    %v1045 = vadd.f32 %v952, %v1044
    %v1046 = vpop.f32.mrb[0].mxu0
    %v1047 = vpop.f32.mrb[0].mxu0
    %v1048 = vadd.f32 %v952, %v1047
    %v1049 = vpop.f32.mrb[0].mxu0
    %1050 = vmatprep.mubr.bf16.mxu0 0
    %1051 = vmatmul.mubr.bf16.gmra.mrb[0].mxu0 %v929
    %v1052 = vpop.f32.mrb[0].mxu0
    %v1053 = vadd.f32 %v952, %v1052
    %v1054 = vpop.f32.mrb[0].mxu0
    %v1055 = vpop.f32.mrb[0].mxu0
    %v1056 = vadd.f32 %v952, %v1055
    %v1057 = vpop.f32.mrb[0].mxu0
    %1058 = vmatprep.mubr.bf16.mxu0 0
    %1059 = vmatmul.mubr.bf16.gmra.mrb[0].mxu0 %v930
    %v1060 = vpop.f32.mrb[0].mxu0
    %v1061 = vadd.f32 %v952, %v1060
    %v1062 = vpop.f32.mrb[0].mxu0
    %v1063 = vpop.f32.mrb[0].mxu0
    %v1064 = vadd.f32 %v952, %v1063
    %v1065 = vpop.f32.mrb[0].mxu0
    %1066 = vdwg.mxu0
    %1067 = vmax.xlane.f32.xlu0 %v1037
    %v1068 = vpop.xlane.xlu0 %1067
    %1069 = vmax.xlane.f32.xlu0 %v1040
    %v1070 = vpop.xlane.xlu0 %1069
    %1071 = vmax.xlane.f32.xlu0 %v1045
    %v1072 = vpop.xlane.xlu0 %1071
    %1073 = vmax.xlane.f32.xlu0 %v1048
    %v1074 = vpop.xlane.xlu0 %1073
    %1075 = vmax.xlane.f32.xlu0 %v1053
    %v1076 = vpop.xlane.xlu0 %1075
    %1077 = vmax.xlane.f32.xlu0 %v1056
    %v1078 = vpop.xlane.xlu0 %1077
    %1079 = vmax.xlane.f32.xlu0 %v1061
    %v1080 = vpop.xlane.xlu0 %1079
    %1081 = vmax.xlane.f32.xlu0 %v1064
    %v1082 = vpop.xlane.xlu0 %1081
    %v1083 = vsub.f32 %v1037, %v1068
    %v1084 = vsub.f32 %v1040, %v1070
    %v1085 = vsub.f32 %v1045, %v1072
    %v1086 = vsub.f32 %v1048, %v1074
    %v1087 = vsub.f32 %v1053, %v1076
    %v1088 = vsub.f32 %v1056, %v1078
    %v1089 = vsub.f32 %v1061, %v1080
    %v1090 = vsub.f32 %v1064, %v1082
    %v1091 = vmul.f32 %v1083, 1.442695
    %v1092 = vpow.pop %v1091
    %v1093 = vmul.f32 %v1084, 1.442695
    %v1094 = vpow.pop %v1093
    %v1095 = vmul.f32 %v1085, 1.442695
    %v1096 = vpow.pop %v1095
    %v1097 = vmul.f32 %v1086, 1.442695
    %v1098 = vpow.pop %v1097
    %v1099 = vmul.f32 %v1087, 1.442695
    %v1100 = vpow.pop %v1099
    %v1101 = vmul.f32 %v1088, 1.442695
    %v1102 = vpow.pop %v1101
    %v1103 = vmul.f32 %v1089, 1.442695
    %v1104 = vpow.pop %v1103
    %v1105 = vmul.f32 %v1090, 1.442695
    %v1106 = vpow.pop %v1105
    %1107 = vadd.xlane.f32.xlu0 %v1092
    %v1108 = vpop.xlane.xlu0 %1107
    %1109 = vadd.xlane.f32.xlu0 %v1094
    %v1110 = vpop.xlane.xlu0 %1109
    %1111 = vadd.xlane.f32.xlu0 %v1096
    %v1112 = vpop.xlane.xlu0 %1111
    %1113 = vadd.xlane.f32.xlu0 %v1098
    %v1114 = vpop.xlane.xlu0 %1113
    %1115 = vadd.xlane.f32.xlu0 %v1100
    %v1116 = vpop.xlane.xlu0 %1115
    %1117 = vadd.xlane.f32.xlu0 %v1102
    %v1118 = vpop.xlane.xlu0 %1117
    %1119 = vadd.xlane.f32.xlu0 %v1104
    %v1120 = vpop.xlane.xlu0 %1119
    %1121 = vadd.xlane.f32.xlu0 %v1106
    %v1122 = vpop.xlane.xlu0 %1121
    %v1123 = vlog2.pop %v1108
    %v1124 = vmul.f32 %v1123, 0.6931472
    %v1125 = vlog2.pop %v1110
    %v1126 = vmul.f32 %v1125, 0.6931472
    %v1127 = vlog2.pop %v1112
    %v1128 = vmul.f32 %v1127, 0.6931472
    %v1129 = vlog2.pop %v1114
    %v1130 = vmul.f32 %v1129, 0.6931472
    %v1131 = vlog2.pop %v1116
    %v1132 = vmul.f32 %v1131, 0.6931472
    %v1133 = vlog2.pop %v1118
    %v1134 = vmul.f32 %v1133, 0.6931472
    %v1135 = vlog2.pop %v1120
    %v1136 = vmul.f32 %v1135, 0.6931472
    %v1137 = vlog2.pop %v1122
    %v1138 = vmul.f32 %v1137, 0.6931472
    %v1139 = vsub.f32 %v1083, %v1124
    %v1140 = vsub.f32 %v1084, %v1126
    %v1141 = vsub.f32 %v1085, %v1128
    %v1142 = vsub.f32 %v1086, %v1130
    %v1143 = vsub.f32 %v1087, %v1132
    %v1144 = vsub.f32 %v1088, %v1134
    %v1145 = vsub.f32 %v1089, %v1136
    %v1146 = vsub.f32 %v1090, %v1138
    %1147 = vst [vmem:[#allocation10] sm:$0xff] %v1139
    %1148 = vst [vmem:[#allocation10 + $0x8] sm:$0xff] %v1140
    %1149 = vst [vmem:[#allocation10 + $0x10] sm:$0xff] %v1141
    %1150 = vst [vmem:[#allocation10 + $0x18] sm:$0xff] %v1142
    %1151 = vst [vmem:[#allocation10 + $0x20] sm:$0xff] %v1143
    %1152 = vst [vmem:[#allocation10 + $0x28] sm:$0xff] %v1144
    %1153 = vst [vmem:[#allocation10 + $0x30] sm:$0xff] %v1145
    %1154 = vst [vmem:[#allocation10 + $0x38] sm:$0xff] %v1146
    // Predicated region
    $region58: #{tpu_custom_call.1} parent=1 // pred_check
      _
    $region59: #{tpu_custom_call.1} parent=1 // pred_check_branch
      %1156 = sbr.rel (0) target = $region61
    $region60: #{tpu_custom_call.1} parent=1 // pred_region
      %s1158 = ssub.s32 1024, 1024
      %1159 = vsyncadd [#allocation4], %s1158
      %s1160 = sshll.u32 [#allocation10], 4
      %s1161 = int_to_ptr.vmem [resolvable:$true] %s1160
      %1166 = dma.vmem_to_hbm [thread:$0]  %s1161, 1024, %s10, [#allocation4], 128, 128, 8
    $region61: #{tpu_custom_call.1} parent=1 // pred_fallthru
      _
    // Predicated region
    $region62: #{tpu_custom_call.1} parent=1 // pred_check
      _
    $region63: #{tpu_custom_call.1} parent=1 // pred_check_branch
      %1168 = sbr.rel (0) target = $region65
    $region64: #{tpu_custom_call.1} parent=1 // pred_region
      %1169 = dma.done [#allocation4], 1024
    $region65: #{tpu_custom_call.1} parent=1 // pred_fallthru
      _
    %1170 = vsyncpa [#allocation3], 1
    %1171 = vsyncpa [#allocation6], 1
    %1172 = vsyncpa [#allocation9], 1
    %1173 = vsyncpa [#allocation4], 1

</llo_original>
